<compile_context>
chip_gen: v6e
topology: v6e:2x2x1
jax: 0.10.0
libtpu: 0.0.40
codegen_flags: <defaults>
</compile_context>

<pallas_src>
import jax
import jax.numpy as jnp
from jax.experimental import pallas as pl
from jax.experimental.pallas import tpu as pltpu

_MIB = 1024 * 1024


def _round_up(n, m):
    return (n + m - 1) // m * m


def _vmem_capacity_bytes():
    """Physical VMEM per TensorCore (128 MiB on v5e/v6e, 64 MiB on v7x)."""
    try:
        cap = getattr(pltpu.get_tpu_info(), "vmem_capacity_bytes", None)
        if cap:
            return int(cap)
    except Exception:
        pass
    return 64 * _MIB  # conservative fallback (v7x-sized)


def mlp_kernel(x_ref, w1_ref, b1_ref, w2_ref, b2_ref, o_ref):
    # x: (TB, F_pad) f32 -> cast to bf16 in-kernel (rides free VPU slots
    # under the MXU; avoids a separate wrapper-side HBM pad/cast pass).
    x = x_ref[...].astype(jnp.bfloat16)
    # Hidden layer: bf16 MXU matmul with f32 accumulation; bias + ReLU in f32.
    h = jnp.dot(x, w1_ref[...], preferred_element_type=jnp.float32) + b1_ref[...]
    h = jnp.maximum(h, 0.0)
    # Output layer: repack activation to bf16 for the MXU, f32 accumulate.
    y = jnp.dot(h.astype(jnp.bfloat16), w2_ref[...],
                preferred_element_type=jnp.float32) + b2_ref[...]
    o_ref[...] = y.astype(o_ref.dtype)


def prepare_mlp_params(w1, b1, w2, b2):
    """One-time parameter preparation (hoisted out of the per-call forward):
    zero-pad every matmul dim to a multiple of 128 (lane alignment) and cast
    the weight matrices to bf16 (MXU-native). Biases stay f32."""
    F, H = w1.shape
    H2, O = w2.shape
    assert H2 == H, "w2 must have shape (n_hidden, n_output)"
    F_pad, H_pad, O_pad = (_round_up(d, 128) for d in (F, H, O))
    w1_p = jnp.zeros((F_pad, H_pad), jnp.bfloat16).at[:F, :H].set(
        w1.astype(jnp.bfloat16))
    w2_p = jnp.zeros((H_pad, O_pad), jnp.bfloat16).at[:H, :O].set(
        w2.astype(jnp.bfloat16))
    b1_p = jnp.zeros((1, H_pad), jnp.float32).at[:, :H].set(
        jnp.asarray(b1, jnp.float32).reshape(1, H))
    b2_p = jnp.zeros((1, O_pad), jnp.float32).at[:, :O].set(
        jnp.asarray(b2, jnp.float32).reshape(1, O))
    return {"w1": w1_p, "b1": b1_p, "w2": w2_p, "b2": b2_p,
            "n_feature": F, "n_hidden": H, "n_output": O}


def mlp_forward(x, params, out_dtype=jnp.float32):
    """x: (B, n_feature); params from prepare_mlp_params.

    Returns (B, n_output) = relu(x @ W1 + b1) @ W2 + b2 in out_dtype
    (bf16 operands, f32 accumulation)."""
    w1_p, b1_p, w2_p, b2_p = params["w1"], params["b1"], params["w2"], params["b2"]
    F, O = params["n_feature"], params["n_output"]
    F_pad, H_pad = w1_p.shape
    O_pad = w2_p.shape[1]
    B = x.shape[0]
    assert x.shape[1] == F

    x_itemsize = jnp.dtype(x.dtype).itemsize
    out_itemsize = jnp.dtype(out_dtype).itemsize
    weight_bytes = (F_pad * H_pad + H_pad * O_pad) * 2 + (H_pad + O_pad) * 4

    # ---- Generation-aware VMEM budget -------------------------------------
    vmem_cap = _vmem_capacity_bytes()
    if vmem_cap >= 128 * _MIB:          # v5e / v6e: 128 MiB physical
        vmem_budget = 100 * _MIB
        inter_cap = 8 * _MIB            # cap on the (TB, H_pad) f32 intermediate
    else:                               # v7x: 64 MiB per TensorCore
        vmem_budget = 56 * _MIB
        inter_cap = 2 * _MIB

    # Single-buffer the grid-invariant weights when double-buffering them
    # would eat too much of the budget (mainly matters on v7x).
    single_buffer_weights = (2 * weight_bytes) > (vmem_budget // 2)
    weight_bufs = 1 if single_buffer_weights else 2

    # ---- Batch-tile selection (16-row aligned: bf16 sublane packing) ------
    B16 = _round_up(B, 16)
    max_tb = max(16, (inter_cap // (4 * H_pad)) // 16 * 16)
    TB = min(512, max_tb)
    if B16 <= TB:
        TB = B16
        if B16 >= 512:
            # Ensure >=2 grid steps so the "parallel" batch axis gives work
            # to both of v7x's TensorCores (no-op cost on v5e/v6e).
            TB = _round_up((B16 + 1) // 2, 16)

    def resident_bytes(tb):
        return (2 * tb * F_pad * x_itemsize            # double-buffered x tiles
                + 2 * tb * O_pad * out_itemsize        # double-buffered out tiles
                + weight_bufs * weight_bytes           # resident weights/biases
                + tb * H_pad * 4 + tb * H_pad * 2      # f32 h temp + bf16 repack
                + tb * O_pad * 4)                      # f32 y temp

    # Shrink the tile (never silently clamp the limit) if the budget is blown.
    while TB > 16 and resident_bytes(TB) > vmem_budget:
        TB = max(16, (TB // 2) // 16 * 16)
    # TODO(synk): if the weights alone exceed the VMEM budget (very large H on
    # v7x), add an "arbitrary" grid axis over H_pad with an f32 accumulator
    # scratch instead of keeping both weight matrices fully resident.

    B_pad = _round_up(B, TB)
    grid = (B_pad // TB,)

    # ---- Pad x only when shapes require it (kept in input dtype; cast
    #      happens in-kernel). Padded rows are sliced off below. -------------
    if (B_pad != B) or (F_pad != F):
        x_in = jnp.zeros((B_pad, F_pad), x.dtype).at[:B, :F].set(x)
    else:
        x_in = x

    vmem_limit = int(min(max(resident_bytes(TB) * 1.35, 32 * _MIB), vmem_budget))

    def weight_spec(shape):
        # Grid-invariant blocks; single-buffer them when VMEM is tight (v7x).
        if single_buffer_weights:
            return pl.BlockSpec(shape, lambda i: (0, 0),
                                pipeline_mode=pl.Buffered(1))
        return pl.BlockSpec(shape, lambda i: (0, 0))

    cost = pl.CostEstimate(
        flops=2 * B_pad * (F_pad * H_pad + H_pad * O_pad),
        transcendentals=0,
        bytes_accessed=(B_pad * F_pad * x_itemsize
                        + (F_pad * H_pad + H_pad * O_pad) * 2
                        + (H_pad + O_pad) * 4
                        + B_pad * O_pad * out_itemsize),
    )

    out_padded = pl.pallas_call(
        mlp_kernel,
        out_shape=jax.ShapeDtypeStruct((B_pad, O_pad), out_dtype),
        grid=grid,
        in_specs=[
            pl.BlockSpec((TB, F_pad), lambda i: (i, 0)),   # x tile (pipelined)
            weight_spec((F_pad, H_pad)),                   # W1 (VMEM-resident)
            weight_spec((1, H_pad)),                       # b1
            weight_spec((H_pad, O_pad)),                   # W2
            weight_spec((1, O_pad)),                       # b2
        ],
        out_specs=pl.BlockSpec((TB, O_pad), lambda i: (i, 0)),
        compiler_params=pltpu.CompilerParams(
            dimension_semantics=("parallel",),
            vmem_limit_bytes=vmem_limit,
        ),
        cost_estimate=cost,
    )(x_in, w1_p, b1_p, w2_p, b2_p)

    return out_padded[:B, :O]


def init_linear_params(key, in_dim, out_dim, dtype=jnp.float32):
    """PyTorch nn.Linear default init: U(-1/sqrt(in_dim), 1/sqrt(in_dim))."""
    k_w, k_b = jax.random.split(key)
    bound = 1.0 / jnp.sqrt(jnp.asarray(in_dim, dtype))
    # Stored as (in_dim, out_dim) == transpose of PyTorch's (out_dim, in_dim).
    w = jax.random.uniform(k_w, (in_dim, out_dim), dtype, minval=-bound, maxval=bound)
    b = jax.random.uniform(k_b, (1, out_dim), dtype, minval=-bound, maxval=bound)
    return w, b


if __name__ == "__main__":
    # Small shapes consistent with the module: MLP(n_feature=32, n_hidden=64, n_output=16)
    batch, n_feature, n_hidden, n_output = 8, 32, 64, 16

    key = jax.random.PRNGKey(0)
    k_x, k_l1, k_l2 = jax.random.split(key, 3)

    x = jax.random.normal(k_x, (batch, n_feature), jnp.float32)
    w1, b1 = init_linear_params(k_l1, n_feature, n_hidden)
    w2, b2 = init_linear_params(k_l2, n_hidden, n_output)

    params = prepare_mlp_params(w1, b1, w2, b2)   # one-time pad + bf16 cast
    out = jax.block_until_ready(mlp_forward(x, params))
    assert out.shape == (batch, n_output)

    # Reference emulating the kernel's bf16-operand / f32-accumulate path.
    xb = x.astype(jnp.bfloat16).astype(jnp.float32)
    w1b = w1.astype(jnp.bfloat16).astype(jnp.float32)
    w2b = w2.astype(jnp.bfloat16).astype(jnp.float32)
    h_ref = jnp.maximum(xb @ w1b + b1, 0.0)
    ref_bf16 = h_ref.astype(jnp.bfloat16).astype(jnp.float32) @ w2b + b2
    assert jnp.allclose(out, ref_bf16, atol=1e-4, rtol=1e-4)

    # Loose sanity check against the pure-f32 PyTorch-equivalent forward.
    ref_f32 = jnp.maximum(x @ w1 + b1, 0.0) @ w2 + b2
    assert jnp.allclose(out, ref_f32, atol=5e-2, rtol=5e-2)

    print("KERNEL_OK")
</pallas_src>

<mosaic_0001>
module attributes {stable_mosaic.version = 11 : i64} {
  func.func @mlp_kernel(%arg0: i32, %arg1: memref<16x128xf32, #tpu.memory_space<vmem>>, %arg2: memref<128x128xbf16, #tpu.memory_space<vmem>>, %arg3: memref<1x128xf32, #tpu.memory_space<vmem>>, %arg4: memref<128x128xbf16, #tpu.memory_space<vmem>>, %arg5: memref<1x128xf32, #tpu.memory_space<vmem>>, %arg6: memref<16x128xf32, #tpu.memory_space<vmem>>) attributes {dimension_semantics = [#tpu.dimension_semantics<parallel>], iteration_bounds = array<i64: 1>, scalar_prefetch = 0 : i64, scratch_operands = 0 : i64, tpu.core_type = #tpu.core_type<tc>, window_params = [{transform_indices = @transform_0, window_bounds = array<i64: 16, 128>}, {pipeline_mode = #tpu.pipeline_mode<synchronous>, transform_indices = @transform_1, window_bounds = array<i64: 128, 128>}, {pipeline_mode = #tpu.pipeline_mode<synchronous>, transform_indices = @transform_2, window_bounds = array<i64: 1, 128>}, {pipeline_mode = #tpu.pipeline_mode<synchronous>, transform_indices = @transform_3, window_bounds = array<i64: 128, 128>}, {pipeline_mode = #tpu.pipeline_mode<synchronous>, transform_indices = @transform_4, window_bounds = array<i64: 1, 128>}, {transform_indices = @transform_5, window_bounds = array<i64: 16, 128>}]} {
    %c0 = arith.constant 0 : index
    %c0_0 = arith.constant 0 : index
    %0 = vector.load %arg1[%c0, %c0_0] : memref<16x128xf32, #tpu.memory_space<vmem>>, vector<16x128xf32>
    %1 = arith.truncf %0 : vector<16x128xf32> to vector<16x128xbf16>
    %c0_1 = arith.constant 0 : index
    %c0_2 = arith.constant 0 : index
    %2 = vector.load %arg2[%c0_1, %c0_2] : memref<128x128xbf16, #tpu.memory_space<vmem>>, vector<128x128xbf16>
    %cst = arith.constant dense<0.000000e+00> : vector<16x128xf32>
    %3 = tpu.matmul %1, %2, %cst {dimension_numbers = #tpu.dot_dimension_numbers<[1], [0], [0], [1], [0, 0, 1, 1], [], []>} : vector<16x128xbf16>, vector<128x128xbf16>, vector<16x128xf32> -> vector<16x128xf32>
    %c0_3 = arith.constant 0 : index
    %c0_4 = arith.constant 0 : index
    %4 = vector.load %arg3[%c0_3, %c0_4] : memref<1x128xf32, #tpu.memory_space<vmem>>, vector<1x128xf32>
    %5 = vector.broadcast %4 : vector<1x128xf32> to vector<16x128xf32>
    %6 = arith.addf %3, %5 : vector<16x128xf32>
    %cst_5 = arith.constant 0.000000e+00 : f32
    %7 = vector.broadcast %cst_5 : f32 to vector<16x128xf32>
    %8 = arith.maximumf %6, %7 : vector<16x128xf32>
    %9 = arith.truncf %8 : vector<16x128xf32> to vector<16x128xbf16>
    %c0_6 = arith.constant 0 : index
    %c0_7 = arith.constant 0 : index
    %10 = vector.load %arg4[%c0_6, %c0_7] : memref<128x128xbf16, #tpu.memory_space<vmem>>, vector<128x128xbf16>
    %cst_8 = arith.constant dense<0.000000e+00> : vector<16x128xf32>
    %11 = tpu.matmul %9, %10, %cst_8 {dimension_numbers = #tpu.dot_dimension_numbers<[1], [0], [0], [1], [0, 0, 1, 1], [], []>} : vector<16x128xbf16>, vector<128x128xbf16>, vector<16x128xf32> -> vector<16x128xf32>
    %c0_9 = arith.constant 0 : index
    %c0_10 = arith.constant 0 : index
    %12 = vector.load %arg5[%c0_9, %c0_10] : memref<1x128xf32, #tpu.memory_space<vmem>>, vector<1x128xf32>
    %13 = vector.broadcast %12 : vector<1x128xf32> to vector<16x128xf32>
    %14 = arith.addf %11, %13 : vector<16x128xf32>
    %c0_11 = arith.constant 0 : index
    %c0_12 = arith.constant 0 : index
    %15 = vector.load %arg6[%c0_11, %c0_12] : memref<16x128xf32, #tpu.memory_space<vmem>>, vector<16x128xf32>
    tpu.vector_store %arg6[%c0_11, %c0_12], %14 {strides = array<i32>} : memref<16x128xf32, #tpu.memory_space<vmem>>, vector<16x128xf32>,
    return
  }
  func.func @transform_0(%arg0: i32) -> (i32, i32) {
    %c0_i32 = arith.constant 0 : i32
    %c0_i32_0 = arith.constant 0 : i32
    return %arg0, %c0_i32 : i32, i32
  }
  func.func @transform_1(%arg0: i32) -> (i32, i32) {
    %c0_i32 = arith.constant 0 : i32
    %c0_i32_0 = arith.constant 0 : i32
    %c0_i32_1 = arith.constant 0 : i32
    return %c0_i32, %c0_i32_0 : i32, i32
  }
  func.func @transform_2(%arg0: i32) -> (i32, i32) {
    %c0_i32 = arith.constant 0 : i32
    %c0_i32_0 = arith.constant 0 : i32
    %c0_i32_1 = arith.constant 0 : i32
    return %c0_i32, %c0_i32_0 : i32, i32
  }
  func.func @transform_3(%arg0: i32) -> (i32, i32) {
    %c0_i32 = arith.constant 0 : i32
    %c0_i32_0 = arith.constant 0 : i32
    %c0_i32_1 = arith.constant 0 : i32
    return %c0_i32, %c0_i32_0 : i32, i32
  }
  func.func @transform_4(%arg0: i32) -> (i32, i32) {
    %c0_i32 = arith.constant 0 : i32
    %c0_i32_0 = arith.constant 0 : i32
    %c0_i32_1 = arith.constant 0 : i32
    return %c0_i32, %c0_i32_0 : i32, i32
  }
  func.func @transform_5(%arg0: i32) -> (i32, i32) {
    %c0_i32 = arith.constant 0 : i32
    %c0_i32_0 = arith.constant 0 : i32
    return %arg0, %c0_i32 : i32, i32
  }
}

</mosaic_0001>

<llo_original>
// kernel: tpu_custom_call.1
$region0: #{tpu_custom_call.1}
  #allocation0 [shape = 'u32[]', space=smem, size = 0x4, offset = 0x4, fixed_abs, tag = 'smem constant byte address 0x4 - core index']
  #allocation1 [shape = 'u32[144,128]{1,0:T(1,128)}', space=vmem, size = 0x12000, scoped, tag = 'internal scratch']
  %s0 = inlined_call_operand.hbm [shape: f32[16,128], index: 0, kind: input, shape index: {}]
  %s1 = inlined_call_operand.hbm [shape: bf16[128,128], index: 1, kind: input, shape index: {}]
  %s2 = inlined_call_operand.vmem [shape: f32[1,128], index: 2, kind: input, shape index: {}]
  %s3 = inlined_call_operand.hbm [shape: bf16[128,128], index: 3, kind: input, shape index: {}]
  %s4 = inlined_call_operand.vmem [shape: f32[1,128], index: 4, kind: input, shape index: {}]
  %s5 = inlined_call_operand.hbm [shape: f32[16,128], index: 5, kind: output, shape index: {}]
  %s6 = sld [smem:[#allocation0]]
  $region42: #{tpu_custom_call.1} parent=0
    _
  %s8 = ssub.s32 1, %s6
  %s9 = scalar_select 0, %s8, %s6
  $region1: #{tpu_custom_call.1} parent=0
    #allocation2 [shape = 'u8[8192]{0}', space=vmem, size = 0x2000, scoped, tag = 'input window, operand 0, single buffered']
    #allocation3 [shape = 's32[1]{0}', space=sflag, size = 0x4, scoped, tag = 'scoped memory for tpu_custom_call.1']
    #allocation4 [shape = 's32[1]{0}', space=sflag, size = 0x4, scoped, tag = 'scoped memory for tpu_custom_call.1']
    #allocation5 [shape = 'u8[32768]{0}', space=vmem, size = 0x8000, scoped, tag = 'input window, operand 1, single buffered']
    #allocation6 [shape = 's32[1]{0}', space=sflag, size = 0x4, scoped, tag = 'scoped memory for tpu_custom_call.1']
    #allocation7 [shape = 'u8[32768]{0}', space=vmem, size = 0x8000, scoped, tag = 'input window, operand 3, single buffered']
    #allocation8 [shape = 'u8[8192]{0}', space=vmem, size = 0x2000, scoped, tag = 'output window, operand 0, single buffered']
    %10 = vsyncpa [#allocation3], 0
    %11 = vsyncpa [#allocation6], 0
    %12 = vsyncpa [#allocation4], 0
    // Predicated region
    $region2: #{tpu_custom_call.1} parent=1 // pred_check
      _
    $region3: #{tpu_custom_call.1} parent=1 // pred_check_branch
      %14 = sbr.rel (0) target = $region5
    $region4: #{tpu_custom_call.1} parent=1 // pred_region
      %s16 = ssub.s32 256, 256
      %17 = vsyncadd [#allocation3], %s16
      %s18 = sshll.u32 [#allocation2], 4
      %s19 = int_to_ptr.vmem [resolvable:$true] %s18
      %24 = dma.hbm_to_vmem [thread:$0]  %s0, 256, %s19, [#allocation3], 128, 128, 8
    $region5: #{tpu_custom_call.1} parent=1 // pred_fallthru
      _
    // Predicated region
    $region6: #{tpu_custom_call.1} parent=1 // pred_check
      _
    $region7: #{tpu_custom_call.1} parent=1 // pred_check_branch
      %26 = sbr.rel (0) target = $region9
    $region8: #{tpu_custom_call.1} parent=1 // pred_region
      %s28 = ssub.s32 1024, 1024
      %29 = vsyncadd [#allocation6], %s28
      %s30 = sshll.u32 [#allocation5], 4
      %s31 = int_to_ptr.vmem [resolvable:$true] %s30
      %36 = dma.hbm_to_vmem [thread:$0]  %s1, 1024, %s31, [#allocation6], 64, 64, 4
    $region9: #{tpu_custom_call.1} parent=1 // pred_fallthru
      _
    // Predicated region
    $region10: #{tpu_custom_call.1} parent=1 // pred_check
      _
    $region11: #{tpu_custom_call.1} parent=1 // pred_check_branch
      %38 = sbr.rel (0) target = $region13
    $region12: #{tpu_custom_call.1} parent=1 // pred_region
      _
    $region13: #{tpu_custom_call.1} parent=1 // pred_fallthru
      _
    // Predicated region
    $region14: #{tpu_custom_call.1} parent=1 // pred_check
      _
    $region15: #{tpu_custom_call.1} parent=1 // pred_check_branch
      %40 = sbr.rel (0) target = $region17
    $region16: #{tpu_custom_call.1} parent=1 // pred_region
      %s42 = ssub.s32 1024, 1024
      %43 = vsyncadd [#allocation6], %s42
      %s44 = sshll.u32 [#allocation7], 4
      %s45 = int_to_ptr.vmem [resolvable:$true] %s44
      %50 = dma.hbm_to_vmem [thread:$0]  %s3, 1024, %s45, [#allocation6], 64, 64, 4
    $region17: #{tpu_custom_call.1} parent=1 // pred_fallthru
      _
    // Predicated region
    $region18: #{tpu_custom_call.1} parent=1 // pred_check
      _
    $region19: #{tpu_custom_call.1} parent=1 // pred_check_branch
      %52 = sbr.rel (0) target = $region21
    $region20: #{tpu_custom_call.1} parent=1 // pred_region
      _
    $region21: #{tpu_custom_call.1} parent=1 // pred_fallthru
      _
    // Predicated region
    $region22: #{tpu_custom_call.1} parent=1 // pred_check
      _
    $region23: #{tpu_custom_call.1} parent=1 // pred_check_branch
      %54 = sbr.rel (0) target = $region25
    $region24: #{tpu_custom_call.1} parent=1 // pred_region
      %55 = dma.done [#allocation3], 256
    $region25: #{tpu_custom_call.1} parent=1 // pred_fallthru
      _
    // Predicated region
    $region26: #{tpu_custom_call.1} parent=1 // pred_check
      _
    $region27: #{tpu_custom_call.1} parent=1 // pred_check_branch
      %57 = sbr.rel (0) target = $region29
    $region28: #{tpu_custom_call.1} parent=1 // pred_region
      %58 = dma.done [#allocation6], 1024
    $region29: #{tpu_custom_call.1} parent=1 // pred_fallthru
      _
    // Predicated region
    $region30: #{tpu_custom_call.1} parent=1 // pred_check
      _
    $region31: #{tpu_custom_call.1} parent=1 // pred_check_branch
      %60 = sbr.rel (0) target = $region33
    $region32: #{tpu_custom_call.1} parent=1 // pred_region
      %61 = dma.done [#allocation6], 1024
    $region33: #{tpu_custom_call.1} parent=1 // pred_fallthru
      _
    %v63 = vld [vmem:[#allocation2] sm:$0xff]
    %v64 = vld [vmem:[#allocation2 + $0x8] sm:$0xff]
    %v65 = vpack.c.bf16 %v64, %v63
    %v66 = vld [vmem:[#allocation5] sm:$0xf]
    %v67 = vld [vmem:[#allocation5 + $0x4] sm:$0xf]
    %v68 = vld [vmem:[#allocation5 + $0x8] sm:$0xf]
    %v69 = vld [vmem:[#allocation5 + $0xc] sm:$0xf]
    %v70 = vld [vmem:[#allocation5 + $0x10] sm:$0xf]
    %v71 = vld [vmem:[#allocation5 + $0x14] sm:$0xf]
    %v72 = vld [vmem:[#allocation5 + $0x18] sm:$0xf]
    %v73 = vld [vmem:[#allocation5 + $0x1c] sm:$0xf]
    %v74 = vld [vmem:[#allocation5 + $0x20] sm:$0xf]
    %v75 = vld [vmem:[#allocation5 + $0x24] sm:$0xf]
    %v76 = vld [vmem:[#allocation5 + $0x28] sm:$0xf]
    %v77 = vld [vmem:[#allocation5 + $0x2c] sm:$0xf]
    %v78 = vld [vmem:[#allocation5 + $0x30] sm:$0xf]
    %v79 = vld [vmem:[#allocation5 + $0x34] sm:$0xf]
    %v80 = vld [vmem:[#allocation5 + $0x38] sm:$0xf]
    %v81 = vld [vmem:[#allocation5 + $0x3c] sm:$0xf]
    %v82 = vld [vmem:[%s2] sm:$0x1]
    %v84 = vlaneseq
    %v85 = vshrl.u32 %v84, 7
    %v86 = vsub.s32 0, %v85
    %v87 = vrot.slane %v82, %v86
    %v105 = vunpack.c.l.b16 %v66
    %v106 = vunpack.c.l.b16 %v67
    %v107 = vunpack.c.l.b16 %v68
    %v108 = vunpack.c.l.b16 %v69
    %v109 = vunpack.c.l.b16 %v70
    %v110 = vunpack.c.l.b16 %v71
    %v111 = vunpack.c.l.b16 %v72
    %v112 = vunpack.c.l.b16 %v73
    %v113 = vunpack.c.l.b16 %v74
    %v114 = vunpack.c.l.b16 %v75
    %v115 = vunpack.c.l.b16 %v76
    %v116 = vunpack.c.l.b16 %v77
    %v117 = vunpack.c.l.b16 %v78
    %v118 = vunpack.c.l.b16 %v79
    %v119 = vunpack.c.l.b16 %v80
    %v120 = vunpack.c.l.b16 %v81
    %v121 = vpack.c.b16 %v106, %v105
    %v122 = vpack.c.b16 %v108, %v107
    %v123 = vpack.c.b16 %v110, %v109
    %v124 = vpack.c.b16 %v112, %v111
    %v125 = vpack.c.b16 %v114, %v113
    %v126 = vpack.c.b16 %v116, %v115
    %v127 = vpack.c.b16 %v118, %v117
    %v128 = vpack.c.b16 %v120, %v119
    %137 = vmatprep.subr.bf16.mxu0 0
    %138 = vmatpush1.bf16.msra.mxu0 %v128
    %139 = vmatprep.subr.bf16.mxu0 0
    %140 = vmatpush1.bf16.msra.mxu0 %v127
    %141 = vmatprep.subr.bf16.mxu0 0
    %142 = vmatpush1.bf16.msra.mxu0 %v126
    %143 = vmatprep.subr.bf16.mxu0 0
    %144 = vmatpush1.bf16.msra.mxu0 %v125
    %145 = vmatprep.subr.bf16.mxu0 0
    %146 = vmatpush1.bf16.msra.mxu0 %v124
    %147 = vmatprep.subr.bf16.mxu0 0
    %148 = vmatpush1.bf16.msra.mxu0 %v123
    %149 = vmatprep.subr.bf16.mxu0 0
    %150 = vmatpush1.bf16.msra.mxu0 %v122
    %151 = vmatprep.subr.bf16.mxu0 0
    %152 = vmatpush1.bf16.msra.mxu0 %v121
    %153 = vmatprep.subr.bf16.mxu0 0
    %154 = vmatpush2.bf16.msra.mxu0 0
    %155 = vmatprep.subr.bf16.mxu0 0
    %156 = vmatpush2.bf16.msra.mxu0 0
    %157 = vmatprep.subr.bf16.mxu0 0
    %158 = vmatpush2.bf16.msra.mxu0 0
    %159 = vmatprep.subr.bf16.mxu0 0
    %160 = vmatpush2.bf16.msra.mxu0 0
    %161 = vmatprep.subr.bf16.mxu0 0
    %162 = vmatpush2.bf16.msra.mxu0 0
    %163 = vmatprep.subr.bf16.mxu0 0
    %164 = vmatpush2.bf16.msra.mxu0 0
    %165 = vmatprep.subr.bf16.mxu0 0
    %166 = vmatpush2.bf16.msra.mxu0 0
    %167 = vmatprep.subr.bf16.mxu0 0
    %168 = vmatpush2.bf16.msra.mxu0 0
    %169 = vmatprep.mubr.bf16.mxu0 0
    %170 = vmatmul.mubr.bf16.gmra.mxu0 %v65
    %v171 = vpop.f32.mrf.mxu0
    %v172 = vadd.f32 %v87, %v171
    %v173 = vpop.f32.mrf.mxu0
    %v174 = vpop.f32.mrf.mxu0
    %v175 = vadd.f32 %v87, %v174
    %v176 = vpop.f32.mrf.mxu0
    %177 = vdwg.mxu0
    %v178 = vmax.f32 %v172, 0.0
    %v179 = vmax.f32 %v175, 0.0
    %v180 = vpack.c.bf16 %v179, %v178
    %v181 = vld [vmem:[#allocation7] sm:$0xf]
    %v182 = vld [vmem:[#allocation7 + $0x4] sm:$0xf]
    %v183 = vld [vmem:[#allocation7 + $0x8] sm:$0xf]
    %v184 = vld [vmem:[#allocation7 + $0xc] sm:$0xf]
    %v185 = vld [vmem:[#allocation7 + $0x10] sm:$0xf]
    %v186 = vld [vmem:[#allocation7 + $0x14] sm:$0xf]
    %v187 = vld [vmem:[#allocation7 + $0x18] sm:$0xf]
    %v188 = vld [vmem:[#allocation7 + $0x1c] sm:$0xf]
    %v189 = vld [vmem:[#allocation7 + $0x20] sm:$0xf]
    %v190 = vld [vmem:[#allocation7 + $0x24] sm:$0xf]
    %v191 = vld [vmem:[#allocation7 + $0x28] sm:$0xf]
    %v192 = vld [vmem:[#allocation7 + $0x2c] sm:$0xf]
    %v193 = vld [vmem:[#allocation7 + $0x30] sm:$0xf]
    %v194 = vld [vmem:[#allocation7 + $0x34] sm:$0xf]
    %v195 = vld [vmem:[#allocation7 + $0x38] sm:$0xf]
    %v196 = vld [vmem:[#allocation7 + $0x3c] sm:$0xf]
    %v197 = vld [vmem:[%s4] sm:$0x1]
    %v199 = vlaneseq
    %v200 = vshrl.u32 %v199, 7
    %v201 = vsub.s32 0, %v200
    %v202 = vrot.slane %v197, %v201
    %v220 = vunpack.c.l.b16 %v181
    %v221 = vunpack.c.l.b16 %v182
    %v222 = vunpack.c.l.b16 %v183
    %v223 = vunpack.c.l.b16 %v184
    %v224 = vunpack.c.l.b16 %v185
    %v225 = vunpack.c.l.b16 %v186
    %v226 = vunpack.c.l.b16 %v187
    %v227 = vunpack.c.l.b16 %v188
    %v228 = vunpack.c.l.b16 %v189
    %v229 = vunpack.c.l.b16 %v190
    %v230 = vunpack.c.l.b16 %v191
    %v231 = vunpack.c.l.b16 %v192
    %v232 = vunpack.c.l.b16 %v193
    %v233 = vunpack.c.l.b16 %v194
    %v234 = vunpack.c.l.b16 %v195
    %v235 = vunpack.c.l.b16 %v196
    %v236 = vpack.c.b16 %v221, %v220
    %v237 = vpack.c.b16 %v223, %v222
    %v238 = vpack.c.b16 %v225, %v224
    %v239 = vpack.c.b16 %v227, %v226
    %v240 = vpack.c.b16 %v229, %v228
    %v241 = vpack.c.b16 %v231, %v230
    %v242 = vpack.c.b16 %v233, %v232
    %v243 = vpack.c.b16 %v235, %v234
    %252 = vmatprep.subr.bf16.mxu0 0
    %253 = vmatpush1.bf16.msra.mxu0 %v243
    %254 = vmatprep.subr.bf16.mxu0 0
    %255 = vmatpush1.bf16.msra.mxu0 %v242
    %256 = vmatprep.subr.bf16.mxu0 0
    %257 = vmatpush1.bf16.msra.mxu0 %v241
    %258 = vmatprep.subr.bf16.mxu0 0
    %259 = vmatpush1.bf16.msra.mxu0 %v240
    %260 = vmatprep.subr.bf16.mxu0 0
    %261 = vmatpush1.bf16.msra.mxu0 %v239
    %262 = vmatprep.subr.bf16.mxu0 0
    %263 = vmatpush1.bf16.msra.mxu0 %v238
    %264 = vmatprep.subr.bf16.mxu0 0
    %265 = vmatpush1.bf16.msra.mxu0 %v237
    %266 = vmatprep.subr.bf16.mxu0 0
    %267 = vmatpush1.bf16.msra.mxu0 %v236
    %268 = vmatprep.subr.bf16.mxu0 0
    %269 = vmatpush2.bf16.msra.mxu0 0
    %270 = vmatprep.subr.bf16.mxu0 0
    %271 = vmatpush2.bf16.msra.mxu0 0
    %272 = vmatprep.subr.bf16.mxu0 0
    %273 = vmatpush2.bf16.msra.mxu0 0
    %274 = vmatprep.subr.bf16.mxu0 0
    %275 = vmatpush2.bf16.msra.mxu0 0
    %276 = vmatprep.subr.bf16.mxu0 0
    %277 = vmatpush2.bf16.msra.mxu0 0
    %278 = vmatprep.subr.bf16.mxu0 0
    %279 = vmatpush2.bf16.msra.mxu0 0
    %280 = vmatprep.subr.bf16.mxu0 0
    %281 = vmatpush2.bf16.msra.mxu0 0
    %282 = vmatprep.subr.bf16.mxu0 0
    %283 = vmatpush2.bf16.msra.mxu0 0
    %284 = vmatprep.mubr.bf16.mxu0 0
    %285 = vmatmul.mubr.bf16.gmra.mxu0 %v180
    %v286 = vpop.f32.mrf.mxu0
    %v287 = vadd.f32 %v202, %v286
    %v288 = vpop.f32.mrf.mxu0
    %v289 = vpop.f32.mrf.mxu0
    %v290 = vadd.f32 %v202, %v289
    %v291 = vpop.f32.mrf.mxu0
    %292 = vdwg.mxu0
    %293 = vst [vmem:[#allocation8] sm:$0xff] %v287
    %294 = vst [vmem:[#allocation8 + $0x8] sm:$0xff] %v290
    // Predicated region
    $region34: #{tpu_custom_call.1} parent=1 // pred_check
      _
    $region35: #{tpu_custom_call.1} parent=1 // pred_check_branch
      %296 = sbr.rel (0) target = $region37
    $region36: #{tpu_custom_call.1} parent=1 // pred_region
      %s298 = ssub.s32 256, 256
      %299 = vsyncadd [#allocation4], %s298
      %s300 = sshll.u32 [#allocation8], 4
      %s301 = int_to_ptr.vmem [resolvable:$true] %s300
      %306 = dma.vmem_to_hbm [thread:$0]  %s301, 256, %s5, [#allocation4], 128, 128, 8
    $region37: #{tpu_custom_call.1} parent=1 // pred_fallthru
      _
    // Predicated region
    $region38: #{tpu_custom_call.1} parent=1 // pred_check
      _
    $region39: #{tpu_custom_call.1} parent=1 // pred_check_branch
      %308 = sbr.rel (0) target = $region41
    $region40: #{tpu_custom_call.1} parent=1 // pred_region
      %309 = dma.done [#allocation4], 256
    $region41: #{tpu_custom_call.1} parent=1 // pred_fallthru
      _
    %310 = vsyncpa [#allocation3], 1
    %311 = vsyncpa [#allocation6], 1
    %312 = vsyncpa [#allocation4], 1

</llo_original>
